<compile_context>
chip_gen: v6e
topology: v6e:2x2x1
jax: 0.10.0
libtpu: 0.0.40
codegen_flags: <defaults>
</compile_context>

<pallas_src>
import functools

import jax
import jax.numpy as jnp
from jax.experimental import pallas as pl
from jax.experimental.pallas import tpu as pltpu


def _round_up(n, m):
    return ((n + m - 1) // m) * m


def _cdiv(a, b):
    return -(-a // b)


def _choose_batch_tiling(B, tb_max=2048):
    """Pick (TB, B_pad) minimizing padded overshoot; even tile count for v7x."""
    n_tiles = _cdiv(B, tb_max)
    # v7x has 2 TensorCores: when more than one tile is needed, make the tile
    # count even so the parallel batch axis splits evenly across cores.
    if n_tiles > 1 and n_tiles % 2 == 1:
        n_tiles += 1
    TB = _round_up(_cdiv(B, n_tiles), 8)
    B_pad = TB * n_tiles
    return TB, B_pad, n_tiles


def _discriminator_kernel(x_ref, w1_ref, b1_ref, w2_ref, b2_ref, out_ref):
    # Biases loaded once per grid step.
    b1 = b1_ref[...]                      # (1, H_pad) f32
    b2 = b2_ref[...]                      # (1, K_pad) f32 (-1e30 in padded cols)

    # bf16 cast of x happens in-kernel (hides under MXU slack; avoids a
    # separate wrapper pad/cast pass over the activations).
    x = x_ref[...].astype(jnp.bfloat16)

    # First linear (bf16 MXU inputs, f32 accumulation) + bias + ReLU in f32.
    h = jnp.dot(x, w1_ref[...], preferred_element_type=jnp.float32) + b1
    h = jnp.maximum(h, 0.0)

    # Dropout(p=0.5): eval-mode forward is identity.
    # TODO(synk): training-mode dropout would need pltpu.prng_seed /
    # pltpu.prng_random_bits masking inside the kernel.

    # Second linear, bf16 inputs / f32 accumulation.  (h -> bf16 is a
    # documented accuracy trade-off vs. pure-f32 PyTorch.)
    logits = jnp.dot(h.astype(jnp.bfloat16), w2_ref[...],
                     preferred_element_type=jnp.float32) + b2

    # Numerically-stable LogSoftmax over the class axis.  Padded classes carry
    # bias -1e30 -> exp underflows to exactly 0, so real-class values are exact.
    m = jnp.max(logits, axis=1, keepdims=True)
    z = logits - m
    lse = jnp.log(jnp.sum(jnp.exp(z), axis=1, keepdims=True))
    out_ref[...] = (z - lse).astype(out_ref.dtype)


def prepare_params(w1, b1, w2, b2):
    """Pad to lane-dense sizes + cast once, outside the per-call forward path.

    w1: (D_in, H), b1: (1, H), w2: (H, K), b2: (1, K)  ->  padded/cast copies.
    """
    H = w1.shape[1]
    K = w2.shape[1]
    H_pad = _round_up(H, 128)
    K_pad = _round_up(K, 128)

    w1p = jnp.pad(w1, ((0, 0), (0, H_pad - H))).astype(jnp.bfloat16)
    b1p = jnp.pad(b1, ((0, 0), (0, H_pad - H))).astype(jnp.float32)
    w2p = jnp.pad(w2, ((0, H_pad - H), (0, K_pad - K))).astype(jnp.bfloat16)
    # -1e30 in padded class columns -> exp() == 0 in the logsumexp (f32-safe;
    # never emit this output as fp16).
    b2p = jnp.pad(b2, ((0, 0), (0, K_pad - K)),
                  constant_values=-1e30).astype(jnp.float32)
    return w1p, b1p, w2p, b2p


@functools.partial(jax.jit, static_argnames=("num_domains",))
def discriminator_forward(x, w1p, b1p, w2p, b2p, *, num_domains):
    """x: (B, D_in) f32; padded params from prepare_params(); -> (B, num_domains) f32."""
    B, D_in = x.shape
    H_pad = w1p.shape[1]
    K_pad = w2p.shape[1]

    TB, B_pad, n_tiles = _choose_batch_tiling(B)

    # Only pad the batch when it doesn't tile evenly (common training batches
    # skip this pass entirely).  x stays f32; the bf16 cast is in-kernel.
    xp = x if B_pad == B else jnp.pad(x, ((0, B_pad - B), (0, 0)))

    out_padded = pl.pallas_call(
        _discriminator_kernel,
        out_shape=jax.ShapeDtypeStruct((B_pad, K_pad), jnp.float32),
        grid_spec=pltpu.PrefetchScalarGridSpec(
            num_scalar_prefetch=0,
            grid=(n_tiles,),
            in_specs=[
                pl.BlockSpec((TB, D_in), lambda i: (i, 0)),     # x tile, pipelined
                pl.BlockSpec((D_in, H_pad), lambda i: (0, 0)),  # w1 resident
                pl.BlockSpec((1, H_pad), lambda i: (0, 0)),     # b1 resident
                pl.BlockSpec((H_pad, K_pad), lambda i: (0, 0)), # w2 resident
                pl.BlockSpec((1, K_pad), lambda i: (0, 0)),     # b2 resident
            ],
            out_specs=pl.BlockSpec((TB, K_pad), lambda i: (i, 0)),
        ),
        compiler_params=pltpu.CompilerParams(
            # Batch tiles are independent; on v7x the two TensorCores split
            # this axis.  (pltpu.CORE_PARALLEL is a further experiment there.)
            dimension_semantics=("parallel",),
        ),
    )(xp, w1p, b1p, w2p, b2p)

    return out_padded[:B, :num_domains]


def init_params(key, input_dim, hidden, num_domains):
    """Deterministic PyTorch-Linear-style init (uniform(-1/sqrt(fan_in), +))."""
    k1, k2, k3, k4 = jax.random.split(key, 4)
    bound1 = 1.0 / jnp.sqrt(input_dim)
    bound2 = 1.0 / jnp.sqrt(hidden)
    w1 = jax.random.uniform(k1, (input_dim, hidden), jnp.float32, -bound1, bound1)
    b1 = jax.random.uniform(k2, (1, hidden), jnp.float32, -bound1, bound1)
    w2 = jax.random.uniform(k3, (hidden, num_domains), jnp.float32, -bound2, bound2)
    b2 = jax.random.uniform(k4, (1, num_domains), jnp.float32, -bound2, bound2)
    return w1, b1, w2, b2


if __name__ == "__main__":
    # Small shapes consistent with the module: input_shape[1]=32 features,
    # hidden=400 (fixed by the module), num_domains=4, batch=8.
    B, D_IN, HIDDEN, NUM_DOMAINS = 8, 32, 400, 4

    key = jax.random.PRNGKey(0)
    kx, kp = jax.random.split(key)
    x = jax.random.normal(kx, (B, D_IN), jnp.float32)
    w1, b1, w2, b2 = init_params(kp, D_IN, HIDDEN, NUM_DOMAINS)

    # Pad/cast the parameters once (hoisted out of the per-call forward path).
    w1p, b1p, w2p, b2p = prepare_params(w1, b1, w2, b2)
    w1p, b1p, w2p, b2p = jax.block_until_ready((w1p, b1p, w2p, b2p))

    out = discriminator_forward(x, w1p, b1p, w2p, b2p, num_domains=NUM_DOMAINS)
    out = jax.block_until_ready(out)
    assert out.shape == (B, NUM_DOMAINS)

    # Reference matching the kernel's numerics (bf16 MXU inputs, f32 accum,
    # eval-mode dropout = identity).
    xb = x.astype(jnp.bfloat16)
    w1b = w1.astype(jnp.bfloat16)
    w2b = w2.astype(jnp.bfloat16)
    h_ref = jnp.maximum(
        jnp.dot(xb, w1b, preferred_element_type=jnp.float32) + b1, 0.0)
    logits_ref = jnp.dot(h_ref.astype(jnp.bfloat16), w2b,
                         preferred_element_type=jnp.float32) + b2
    ref_bf16 = jax.nn.log_softmax(logits_ref, axis=1)
    assert jnp.allclose(out, ref_bf16, atol=1e-3, rtol=1e-3)

    # Loose check against the pure-f32 unpadded math (semantics preserved).
    ref_f32 = jax.nn.log_softmax(jnp.maximum(x @ w1 + b1, 0.0) @ w2 + b2, axis=1)
    assert jnp.allclose(out, ref_f32, atol=5e-2, rtol=5e-2)

    print("KERNEL_OK")
</pallas_src>

<mosaic_0001>
module attributes {stable_mosaic.version = 11 : i64} {
  func.func @_discriminator_kernel(%arg0: i32, %arg1: memref<8x32xf32, #tpu.memory_space<vmem>>, %arg2: memref<32x512xbf16, #tpu.memory_space<vmem>>, %arg3: memref<1x512xf32, #tpu.memory_space<vmem>>, %arg4: memref<512x128xbf16, #tpu.memory_space<vmem>>, %arg5: memref<1x128xf32, #tpu.memory_space<vmem>>, %arg6: memref<8x128xf32, #tpu.memory_space<vmem>>) attributes {dimension_semantics = [#tpu.dimension_semantics<parallel>], iteration_bounds = array<i64: 1>, scalar_prefetch = 0 : i64, scratch_operands = 0 : i64, tpu.core_type = #tpu.core_type<tc>, window_params = [{transform_indices = @transform_0, window_bounds = array<i64: 8, 32>}, {pipeline_mode = #tpu.pipeline_mode<synchronous>, transform_indices = @transform_1, window_bounds = array<i64: 32, 512>}, {pipeline_mode = #tpu.pipeline_mode<synchronous>, transform_indices = @transform_2, window_bounds = array<i64: 1, 512>}, {pipeline_mode = #tpu.pipeline_mode<synchronous>, transform_indices = @transform_3, window_bounds = array<i64: 512, 128>}, {pipeline_mode = #tpu.pipeline_mode<synchronous>, transform_indices = @transform_4, window_bounds = array<i64: 1, 128>}, {transform_indices = @transform_5, window_bounds = array<i64: 8, 128>}]} {
    %c0 = arith.constant 0 : index
    %c0_0 = arith.constant 0 : index
    %0 = vector.load %arg3[%c0, %c0_0] : memref<1x512xf32, #tpu.memory_space<vmem>>, vector<1x512xf32>
    %c0_1 = arith.constant 0 : index
    %c0_2 = arith.constant 0 : index
    %1 = vector.load %arg5[%c0_1, %c0_2] : memref<1x128xf32, #tpu.memory_space<vmem>>, vector<1x128xf32>
    %c0_3 = arith.constant 0 : index
    %c0_4 = arith.constant 0 : index
    %2 = vector.load %arg1[%c0_3, %c0_4] : memref<8x32xf32, #tpu.memory_space<vmem>>, vector<8x32xf32>
    %3 = arith.truncf %2 : vector<8x32xf32> to vector<8x32xbf16>
    %c0_5 = arith.constant 0 : index
    %c0_6 = arith.constant 0 : index
    %4 = vector.load %arg2[%c0_5, %c0_6] : memref<32x512xbf16, #tpu.memory_space<vmem>>, vector<32x512xbf16>
    %cst = arith.constant dense<0.000000e+00> : vector<8x512xf32>
    %5 = tpu.matmul %3, %4, %cst {dimension_numbers = #tpu.dot_dimension_numbers<[1], [0], [0], [1], [0, 0, 1, 1], [], []>} : vector<8x32xbf16>, vector<32x512xbf16>, vector<8x512xf32> -> vector<8x512xf32>
    %6 = vector.broadcast %0 : vector<1x512xf32> to vector<8x512xf32>
    %7 = arith.addf %5, %6 : vector<8x512xf32>
    %cst_7 = arith.constant 0.000000e+00 : f32
    %8 = vector.broadcast %cst_7 : f32 to vector<8x512xf32>
    %9 = arith.maximumf %7, %8 : vector<8x512xf32>
    %10 = arith.truncf %9 : vector<8x512xf32> to vector<8x512xbf16>
    %c0_8 = arith.constant 0 : index
    %c0_9 = arith.constant 0 : index
    %11 = vector.load %arg4[%c0_8, %c0_9] : memref<512x128xbf16, #tpu.memory_space<vmem>>, vector<512x128xbf16>
    %cst_10 = arith.constant dense<0.000000e+00> : vector<8x128xf32>
    %12 = tpu.matmul %10, %11, %cst_10 {dimension_numbers = #tpu.dot_dimension_numbers<[1], [0], [0], [1], [0, 0, 1, 1], [], []>} : vector<8x512xbf16>, vector<512x128xbf16>, vector<8x128xf32> -> vector<8x128xf32>
    %13 = vector.broadcast %1 : vector<1x128xf32> to vector<8x128xf32>
    %14 = arith.addf %12, %13 : vector<8x128xf32>
    %cst_11 = arith.constant dense<0xFF800000> : vector<8xf32>
    %15 = vector.multi_reduction <maximumf>, %14, %cst_11 [1] : vector<8x128xf32> to vector<8xf32>
    %16 = vector.shape_cast %15 : vector<8xf32> to vector<8x1xf32>
    %17 = vector.broadcast %16 : vector<8x1xf32> to vector<8x128xf32>
    %18 = arith.subf %14, %17 : vector<8x128xf32>
    %19 = math.exp %18 : vector<8x128xf32>
    %cst_12 = arith.constant dense<0.000000e+00> : vector<8xf32>
    %20 = vector.multi_reduction <add>, %19, %cst_12 [1] : vector<8x128xf32> to vector<8xf32>
    %21 = vector.shape_cast %20 : vector<8xf32> to vector<8x1xf32>
    %22 = math.log %21 : vector<8x1xf32>
    %23 = vector.broadcast %22 : vector<8x1xf32> to vector<8x128xf32>
    %24 = arith.subf %18, %23 : vector<8x128xf32>
    %c0_13 = arith.constant 0 : index
    %c0_14 = arith.constant 0 : index
    %25 = vector.load %arg6[%c0_13, %c0_14] : memref<8x128xf32, #tpu.memory_space<vmem>>, vector<8x128xf32>
    tpu.vector_store %arg6[%c0_13, %c0_14], %24 {strides = array<i32>} : memref<8x128xf32, #tpu.memory_space<vmem>>, vector<8x128xf32>,
    return
  }
  func.func @transform_0(%arg0: i32) -> (i32, i32) {
    %c0_i32 = arith.constant 0 : i32
    %c0_i32_0 = arith.constant 0 : i32
    return %arg0, %c0_i32 : i32, i32
  }
  func.func @transform_1(%arg0: i32) -> (i32, i32) {
    %c0_i32 = arith.constant 0 : i32
    %c0_i32_0 = arith.constant 0 : i32
    %c0_i32_1 = arith.constant 0 : i32
    return %c0_i32, %c0_i32_0 : i32, i32
  }
  func.func @transform_2(%arg0: i32) -> (i32, i32) {
    %c0_i32 = arith.constant 0 : i32
    %c0_i32_0 = arith.constant 0 : i32
    %c0_i32_1 = arith.constant 0 : i32
    return %c0_i32, %c0_i32_0 : i32, i32
  }
  func.func @transform_3(%arg0: i32) -> (i32, i32) {
    %c0_i32 = arith.constant 0 : i32
    %c0_i32_0 = arith.constant 0 : i32
    %c0_i32_1 = arith.constant 0 : i32
    return %c0_i32, %c0_i32_0 : i32, i32
  }
  func.func @transform_4(%arg0: i32) -> (i32, i32) {
    %c0_i32 = arith.constant 0 : i32
    %c0_i32_0 = arith.constant 0 : i32
    %c0_i32_1 = arith.constant 0 : i32
    return %c0_i32, %c0_i32_0 : i32, i32
  }
  func.func @transform_5(%arg0: i32) -> (i32, i32) {
    %c0_i32 = arith.constant 0 : i32
    %c0_i32_0 = arith.constant 0 : i32
    return %arg0, %c0_i32 : i32, i32
  }
}

</mosaic_0001>

<llo_original>
// kernel: discriminator_forward.1
$region0: #{discriminator_forward.1}
  #allocation0 [shape = 'u32[]', space=smem, size = 0x4, offset = 0x4, fixed_abs, tag = 'smem constant byte address 0x4 - core index']
  #allocation1 [shape = 'u32[144,128]{1,0:T(1,128)}', space=vmem, size = 0x12000, scoped, tag = 'internal scratch']
  %s0 = inlined_call_operand.hbm [shape: f32[8,32], index: 0, kind: input, shape index: {}]
  %s1 = inlined_call_operand.hbm [shape: bf16[32,512], index: 1, kind: input, shape index: {}]
  %s2 = inlined_call_operand.hbm [shape: f32[1,512], index: 2, kind: input, shape index: {}]
  %s3 = inlined_call_operand.hbm [shape: bf16[512,128], index: 3, kind: input, shape index: {}]
  %s4 = inlined_call_operand.vmem [shape: f32[1,128], index: 4, kind: input, shape index: {}]
  %s5 = inlined_call_operand.vmem [shape: f32[8,128], index: 5, kind: output, shape index: {}]
  %s6 = sld [smem:[#allocation0]]
  $region46: #{discriminator_forward.1} parent=0
    _
  %s8 = ssub.s32 1, %s6
  %s9 = scalar_select 0, %s8, %s6
  $region1: #{discriminator_forward.1} parent=0
    #allocation2 [shape = 'u8[4096]{0}', space=vmem, size = 0x1000, scoped, tag = 'input window, operand 0, single buffered']
    #allocation3 [shape = 's32[1]{0}', space=sflag, size = 0x4, scoped, tag = 'scoped memory for discriminator_forward.1']
    #allocation4 [shape = 'u8[32768]{0}', space=vmem, size = 0x8000, scoped, tag = 'input window, operand 1, single buffered']
    #allocation5 [shape = 's32[1]{0}', space=sflag, size = 0x4, scoped, tag = 'scoped memory for discriminator_forward.1']
    #allocation6 [shape = 'u8[2048]{0}', space=vmem, size = 0x800, scoped, tag = 'input window, operand 2, single buffered']
    #allocation7 [shape = 'u8[131072]{0}', space=vmem, size = 0x20000, scoped, tag = 'input window, operand 3, single buffered']
    #allocation8 [shape = 's32[1]{0}', space=sflag, size = 0x4, scoped, tag = 'scoped memory for discriminator_forward.1']
    %10 = vsyncpa [#allocation3], 0
    %11 = vsyncpa [#allocation5], 0
    %12 = vsyncpa [#allocation8], 0
    // Predicated region
    $region2: #{discriminator_forward.1} parent=1 // pred_check
      _
    $region3: #{discriminator_forward.1} parent=1 // pred_check_branch
      %14 = sbr.rel (0) target = $region5
    $region4: #{discriminator_forward.1} parent=1 // pred_region
      %s16 = ssub.s32 128, 128
      %17 = vsyncadd [#allocation3], %s16
      %s19 = sshll.u32 [#allocation2], 4
      %s20 = int_to_ptr.vmem [resolvable:$true] %s19
      %22 = dma.hbm_to_vmem [thread:$0]  %s0, 128, %s20, [#allocation3]
    $region5: #{discriminator_forward.1} parent=1 // pred_fallthru
      _
    // Predicated region
    $region6: #{discriminator_forward.1} parent=1 // pred_check
      _
    $region7: #{discriminator_forward.1} parent=1 // pred_check_branch
      %24 = sbr.rel (0) target = $region9
    $region8: #{discriminator_forward.1} parent=1 // pred_region
      %s26 = ssub.s32 1024, 1024
      %27 = vsyncadd [#allocation5], %s26
      %s28 = sshll.u32 [#allocation4], 4
      %s29 = int_to_ptr.vmem [resolvable:$true] %s28
      %34 = dma.hbm_to_vmem [thread:$0]  %s1, 1024, %s29, [#allocation5], 256, 256, 16
    $region9: #{discriminator_forward.1} parent=1 // pred_fallthru
      _
    // Predicated region
    $region10: #{discriminator_forward.1} parent=1 // pred_check
      _
    $region11: #{discriminator_forward.1} parent=1 // pred_check_branch
      %36 = sbr.rel (0) target = $region13
    $region12: #{discriminator_forward.1} parent=1 // pred_region
      %s38 = ssub.s32 64, 64
      %39 = vsyncadd [#allocation5], %s38
      %s41 = sshll.u32 [#allocation6], 4
      %s42 = int_to_ptr.vmem [resolvable:$true] %s41
      %44 = dma.hbm_to_vmem [thread:$0]  %s2, 64, %s42, [#allocation5]
    $region13: #{discriminator_forward.1} parent=1 // pred_fallthru
      _
    // Predicated region
    $region14: #{discriminator_forward.1} parent=1 // pred_check
      _
    $region15: #{discriminator_forward.1} parent=1 // pred_check_branch
      %46 = sbr.rel (0) target = $region17
    $region16: #{discriminator_forward.1} parent=1 // pred_region
      %s48 = ssub.s32 4096, 4096
      %49 = vsyncadd [#allocation8], %s48
      %s50 = sshll.u32 [#allocation7], 4
      %s51 = int_to_ptr.vmem [resolvable:$true] %s50
      %56 = dma.hbm_to_vmem [thread:$0]  %s3, 4096, %s51, [#allocation8], 64, 64, 4
    $region17: #{discriminator_forward.1} parent=1 // pred_fallthru
      _
    // Predicated region
    $region18: #{discriminator_forward.1} parent=1 // pred_check
      _
    $region19: #{discriminator_forward.1} parent=1 // pred_check_branch
      %58 = sbr.rel (0) target = $region21
    $region20: #{discriminator_forward.1} parent=1 // pred_region
      _
    $region21: #{discriminator_forward.1} parent=1 // pred_fallthru
      _
    // Predicated region
    $region22: #{discriminator_forward.1} parent=1 // pred_check
      _
    $region23: #{discriminator_forward.1} parent=1 // pred_check_branch
      %60 = sbr.rel (0) target = $region25
    $region24: #{discriminator_forward.1} parent=1 // pred_region
      %61 = dma.done [#allocation3], 128
    $region25: #{discriminator_forward.1} parent=1 // pred_fallthru
      _
    // Predicated region
    $region26: #{discriminator_forward.1} parent=1 // pred_check
      _
    $region27: #{discriminator_forward.1} parent=1 // pred_check_branch
      %63 = sbr.rel (0) target = $region29
    $region28: #{discriminator_forward.1} parent=1 // pred_region
      %64 = dma.done [#allocation5], 1024
    $region29: #{discriminator_forward.1} parent=1 // pred_fallthru
      _
    // Predicated region
    $region30: #{discriminator_forward.1} parent=1 // pred_check
      _
    $region31: #{discriminator_forward.1} parent=1 // pred_check_branch
      %66 = sbr.rel (0) target = $region33
    $region32: #{discriminator_forward.1} parent=1 // pred_region
      %67 = dma.done [#allocation5], 64
    $region33: #{discriminator_forward.1} parent=1 // pred_fallthru
      _
    // Predicated region
    $region34: #{discriminator_forward.1} parent=1 // pred_check
      _
    $region35: #{discriminator_forward.1} parent=1 // pred_check_branch
      %69 = sbr.rel (0) target = $region37
    $region36: #{discriminator_forward.1} parent=1 // pred_region
      %70 = dma.done [#allocation8], 4096
    $region37: #{discriminator_forward.1} parent=1 // pred_fallthru
      _
    %v72 = vld [vmem:[#allocation6] sm:$0xf]
    %v73 = vld [vmem:[%s4] sm:$0x1]
    %v74 = vld [vmem:[#allocation2] sm:$0xff]
    %v75 = vpack.c.bf16 %v74, %v74
    %v76 = vld [vmem:[#allocation4] sm:$0xff]
    %v77 = vld [vmem:[#allocation4 + $0x8] sm:$0xff]
    %v78 = vld [vmem:[#allocation4 + $0x10] sm:$0xff]
    %v79 = vld [vmem:[#allocation4 + $0x18] sm:$0xff]
    %v80 = vld [vmem:[#allocation4 + $0x20] sm:$0xff]
    %v81 = vld [vmem:[#allocation4 + $0x28] sm:$0xff]
    %v82 = vld [vmem:[#allocation4 + $0x30] sm:$0xff]
    %v83 = vld [vmem:[#allocation4 + $0x38] sm:$0xff]
    %v85 = vlaneseq
    %v86 = vshrl.u32 %v85, 7
    %v87 = vsub.s32 0, %v86
    %v88 = vrot.slane %v72, %v87
    %v89 = vlaneseq
    %v90 = vshrl.u32 %v89, 7
    %v91 = vsub.s32 1, %v90
    %v92 = vrot.slane %v72, %v91
    %v93 = vlaneseq
    %v94 = vshrl.u32 %v93, 7
    %v95 = vsub.s32 2, %v94
    %v96 = vrot.slane %v72, %v95
    %v97 = vlaneseq
    %v98 = vshrl.u32 %v97, 7
    %v99 = vsub.s32 3, %v98
    %v100 = vrot.slane %v72, %v99
    %v113 = vunpack.c.l.b16 %v76
    %v114 = vunpack.c.h.b16 %v76
    %v115 = vunpack.c.l.b16 %v77
    %v116 = vunpack.c.h.b16 %v77
    %v117 = vunpack.c.l.b16 %v78
    %v118 = vunpack.c.h.b16 %v78
    %v119 = vunpack.c.l.b16 %v79
    %v120 = vunpack.c.h.b16 %v79
    %v121 = vunpack.c.l.b16 %v80
    %v122 = vunpack.c.h.b16 %v80
    %v123 = vunpack.c.l.b16 %v81
    %v124 = vunpack.c.h.b16 %v81
    %v125 = vunpack.c.l.b16 %v82
    %v126 = vunpack.c.h.b16 %v82
    %v127 = vunpack.c.l.b16 %v83
    %v128 = vunpack.c.h.b16 %v83
    %v129 = vpack.c.b16 %v117, %v113
    %v130 = vpack.c.b16 %v118, %v114
    %v131 = vpack.c.b16 %v119, %v115
    %v132 = vpack.c.b16 %v120, %v116
    %v133 = vpack.c.b16 %v125, %v121
    %v134 = vpack.c.b16 %v126, %v122
    %v135 = vpack.c.b16 %v127, %v123
    %v136 = vpack.c.b16 %v128, %v124
    %vm145 = vcmask 261120
    %v147 = vsel %vm145, %v75, 0
    %149 = vmatprep.subr.bf16.mxu0 0
    %150 = vmatpush1.bf16.msra.mxu0 0
    %151 = vmatprep.subr.bf16.mxu0 0
    %152 = vmatpush1.bf16.msra.mxu0 0
    %153 = vmatprep.subr.bf16.mxu0 0
    %154 = vmatpush1.bf16.msra.mxu0 0
    %155 = vmatprep.subr.bf16.mxu0 0
    %156 = vmatpush1.bf16.msra.mxu0 0
    %157 = vmatprep.subr.bf16.mxu0 0
    %158 = vmatpush1.bf16.msra.mxu0 0
    %159 = vmatprep.subr.bf16.mxu0 0
    %160 = vmatpush1.bf16.msra.mxu0 0
    %161 = vmatprep.subr.bf16.mxu0 %v134
    %162 = vmatpush1.bf16.msra.mxu0 %v133
    %163 = vmatprep.subr.bf16.mxu0 %v130
    %164 = vmatpush1.bf16.msra.mxu0 %v129
    %165 = vmatprep.subr.bf16.mxu0 0
    %166 = vmatpush2.bf16.msra.mxu0 0
    %167 = vmatprep.subr.bf16.mxu0 0
    %168 = vmatpush2.bf16.msra.mxu0 0
    %169 = vmatprep.subr.bf16.mxu0 0
    %170 = vmatpush2.bf16.msra.mxu0 0
    %171 = vmatprep.subr.bf16.mxu0 0
    %172 = vmatpush2.bf16.msra.mxu0 0
    %173 = vmatprep.subr.bf16.mxu0 0
    %174 = vmatpush2.bf16.msra.mxu0 0
    %175 = vmatprep.subr.bf16.mxu0 0
    %176 = vmatpush2.bf16.msra.mxu0 0
    %177 = vmatprep.subr.bf16.mxu0 0
    %178 = vmatpush2.bf16.msra.mxu0 0
    %179 = vmatprep.subr.bf16.mxu0 0
    %180 = vmatpush2.bf16.msra.mxu0 0
    %181 = vmatprep.mubr.bf16.mxu0 0
    %182 = vmatmul.mubr.bf16.gmra.mxu0 %v147
    %v183 = vpop.f32.mrf.mxu0
    %v184 = vadd.f32 %v88, %v183
    %v185 = vpop.f32.mrf.mxu0
    %v186 = vadd.f32 %v92, %v185
    %v187 = vpop.f32.mrf.mxu0
    %v188 = vpop.f32.mrf.mxu0
    %189 = vdwg.mxu0
    %190 = vmatprep.subr.bf16.mxu0 0
    %191 = vmatpush1.bf16.msra.mxu0 0
    %192 = vmatprep.subr.bf16.mxu0 0
    %193 = vmatpush1.bf16.msra.mxu0 0
    %194 = vmatprep.subr.bf16.mxu0 0
    %195 = vmatpush1.bf16.msra.mxu0 0
    %196 = vmatprep.subr.bf16.mxu0 0
    %197 = vmatpush1.bf16.msra.mxu0 0
    %198 = vmatprep.subr.bf16.mxu0 0
    %199 = vmatpush1.bf16.msra.mxu0 0
    %200 = vmatprep.subr.bf16.mxu0 0
    %201 = vmatpush1.bf16.msra.mxu0 0
    %202 = vmatprep.subr.bf16.mxu0 %v136
    %203 = vmatpush1.bf16.msra.mxu0 %v135
    %204 = vmatprep.subr.bf16.mxu0 %v132
    %205 = vmatpush1.bf16.msra.mxu0 %v131
    %206 = vmatprep.subr.bf16.mxu0 0
    %207 = vmatpush2.bf16.msra.mxu0 0
    %208 = vmatprep.subr.bf16.mxu0 0
    %209 = vmatpush2.bf16.msra.mxu0 0
    %210 = vmatprep.subr.bf16.mxu0 0
    %211 = vmatpush2.bf16.msra.mxu0 0
    %212 = vmatprep.subr.bf16.mxu0 0
    %213 = vmatpush2.bf16.msra.mxu0 0
    %214 = vmatprep.subr.bf16.mxu0 0
    %215 = vmatpush2.bf16.msra.mxu0 0
    %216 = vmatprep.subr.bf16.mxu0 0
    %217 = vmatpush2.bf16.msra.mxu0 0
    %218 = vmatprep.subr.bf16.mxu0 0
    %219 = vmatpush2.bf16.msra.mxu0 0
    %220 = vmatprep.subr.bf16.mxu0 0
    %221 = vmatpush2.bf16.msra.mxu0 0
    %222 = vmatprep.mubr.bf16.mxu0 0
    %223 = vmatmul.mubr.bf16.gmra.mxu0 %v147
    %v224 = vpop.f32.mrf.mxu0
    %v225 = vadd.f32 %v96, %v224
    %v226 = vpop.f32.mrf.mxu0
    %v227 = vadd.f32 %v100, %v226
    %v228 = vpop.f32.mrf.mxu0
    %v229 = vpop.f32.mrf.mxu0
    %230 = vdwg.mxu0
    %v231 = vmax.f32 %v184, 0.0
    %v232 = vmax.f32 %v186, 0.0
    %v233 = vmax.f32 %v225, 0.0
    %v234 = vmax.f32 %v227, 0.0
    %v235 = vpack.c.bf16 %v231, %v231
    %v236 = vpack.c.bf16 %v232, %v232
    %v237 = vpack.c.bf16 %v233, %v233
    %v238 = vpack.c.bf16 %v234, %v234
    %v239 = vld [vmem:[#allocation7] sm:$0xf]
    %v240 = vld [vmem:[#allocation7 + $0x4] sm:$0xf]
    %v241 = vld [vmem:[#allocation7 + $0x8] sm:$0xf]
    %v242 = vld [vmem:[#allocation7 + $0xc] sm:$0xf]
    %v243 = vld [vmem:[#allocation7 + $0x10] sm:$0xf]
    %v244 = vld [vmem:[#allocation7 + $0x14] sm:$0xf]
    %v245 = vld [vmem:[#allocation7 + $0x18] sm:$0xf]
    %v246 = vld [vmem:[#allocation7 + $0x1c] sm:$0xf]
    %v247 = vld [vmem:[#allocation7 + $0x20] sm:$0xf]
    %v248 = vld [vmem:[#allocation7 + $0x24] sm:$0xf]
    %v249 = vld [vmem:[#allocation7 + $0x28] sm:$0xf]
    %v250 = vld [vmem:[#allocation7 + $0x2c] sm:$0xf]
    %v251 = vld [vmem:[#allocation7 + $0x30] sm:$0xf]
    %v252 = vld [vmem:[#allocation7 + $0x34] sm:$0xf]
    %v253 = vld [vmem:[#allocation7 + $0x38] sm:$0xf]
    %v254 = vld [vmem:[#allocation7 + $0x3c] sm:$0xf]
    %v255 = vld [vmem:[#allocation7 + $0x40] sm:$0xf]
    %v256 = vld [vmem:[#allocation7 + $0x44] sm:$0xf]
    %v257 = vld [vmem:[#allocation7 + $0x48] sm:$0xf]
    %v258 = vld [vmem:[#allocation7 + $0x4c] sm:$0xf]
    %v259 = vld [vmem:[#allocation7 + $0x50] sm:$0xf]
    %v260 = vld [vmem:[#allocation7 + $0x54] sm:$0xf]
    %v261 = vld [vmem:[#allocation7 + $0x58] sm:$0xf]
    %v262 = vld [vmem:[#allocation7 + $0x5c] sm:$0xf]
    %v263 = vld [vmem:[#allocation7 + $0x60] sm:$0xf]
    %v264 = vld [vmem:[#allocation7 + $0x64] sm:$0xf]
    %v265 = vld [vmem:[#allocation7 + $0x68] sm:$0xf]
    %v266 = vld [vmem:[#allocation7 + $0x6c] sm:$0xf]
    %v267 = vld [vmem:[#allocation7 + $0x70] sm:$0xf]
    %v268 = vld [vmem:[#allocation7 + $0x74] sm:$0xf]
    %v269 = vld [vmem:[#allocation7 + $0x78] sm:$0xf]
    %v270 = vld [vmem:[#allocation7 + $0x7c] sm:$0xf]
    %v271 = vld [vmem:[#allocation7 + $0x80] sm:$0xf]
    %v272 = vld [vmem:[#allocation7 + $0x84] sm:$0xf]
    %v273 = vld [vmem:[#allocation7 + $0x88] sm:$0xf]
    %v274 = vld [vmem:[#allocation7 + $0x8c] sm:$0xf]
    %v275 = vld [vmem:[#allocation7 + $0x90] sm:$0xf]
    %v276 = vld [vmem:[#allocation7 + $0x94] sm:$0xf]
    %v277 = vld [vmem:[#allocation7 + $0x98] sm:$0xf]
    %v278 = vld [vmem:[#allocation7 + $0x9c] sm:$0xf]
    %v279 = vld [vmem:[#allocation7 + $0xa0] sm:$0xf]
    %v280 = vld [vmem:[#allocation7 + $0xa4] sm:$0xf]
    %v281 = vld [vmem:[#allocation7 + $0xa8] sm:$0xf]
    %v282 = vld [vmem:[#allocation7 + $0xac] sm:$0xf]
    %v283 = vld [vmem:[#allocation7 + $0xb0] sm:$0xf]
    %v284 = vld [vmem:[#allocation7 + $0xb4] sm:$0xf]
    %v285 = vld [vmem:[#allocation7 + $0xb8] sm:$0xf]
    %v286 = vld [vmem:[#allocation7 + $0xbc] sm:$0xf]
    %v287 = vld [vmem:[#allocation7 + $0xc0] sm:$0xf]
    %v288 = vld [vmem:[#allocation7 + $0xc4] sm:$0xf]
    %v289 = vld [vmem:[#allocation7 + $0xc8] sm:$0xf]
    %v290 = vld [vmem:[#allocation7 + $0xcc] sm:$0xf]
    %v291 = vld [vmem:[#allocation7 + $0xd0] sm:$0xf]
    %v292 = vld [vmem:[#allocation7 + $0xd4] sm:$0xf]
    %v293 = vld [vmem:[#allocation7 + $0xd8] sm:$0xf]
    %v294 = vld [vmem:[#allocation7 + $0xdc] sm:$0xf]
    %v295 = vld [vmem:[#allocation7 + $0xe0] sm:$0xf]
    %v296 = vld [vmem:[#allocation7 + $0xe4] sm:$0xf]
    %v297 = vld [vmem:[#allocation7 + $0xe8] sm:$0xf]
    %v298 = vld [vmem:[#allocation7 + $0xec] sm:$0xf]
    %v299 = vld [vmem:[#allocation7 + $0xf0] sm:$0xf]
    %v300 = vld [vmem:[#allocation7 + $0xf4] sm:$0xf]
    %v301 = vld [vmem:[#allocation7 + $0xf8] sm:$0xf]
    %v302 = vld [vmem:[#allocation7 + $0xfc] sm:$0xf]
    %v304 = vlaneseq
    %v305 = vshrl.u32 %v304, 7
    %v306 = vsub.s32 0, %v305
    %v307 = vrot.slane %v73, %v306
    %v373 = vunpack.c.l.b16 %v239
    %v374 = vunpack.c.l.b16 %v240
    %v375 = vunpack.c.l.b16 %v241
    %v376 = vunpack.c.l.b16 %v242
    %v377 = vunpack.c.l.b16 %v243
    %v378 = vunpack.c.l.b16 %v244
    %v379 = vunpack.c.l.b16 %v245
    %v380 = vunpack.c.l.b16 %v246
    %v381 = vunpack.c.l.b16 %v247
    %v382 = vunpack.c.l.b16 %v248
    %v383 = vunpack.c.l.b16 %v249
    %v384 = vunpack.c.l.b16 %v250
    %v385 = vunpack.c.l.b16 %v251
    %v386 = vunpack.c.l.b16 %v252
    %v387 = vunpack.c.l.b16 %v253
    %v388 = vunpack.c.l.b16 %v254
    %v389 = vunpack.c.l.b16 %v255
    %v390 = vunpack.c.l.b16 %v256
    %v391 = vunpack.c.l.b16 %v257
    %v392 = vunpack.c.l.b16 %v258
    %v393 = vunpack.c.l.b16 %v259
    %v394 = vunpack.c.l.b16 %v260
    %v395 = vunpack.c.l.b16 %v261
    %v396 = vunpack.c.l.b16 %v262
    %v397 = vunpack.c.l.b16 %v263
    %v398 = vunpack.c.l.b16 %v264
    %v399 = vunpack.c.l.b16 %v265
    %v400 = vunpack.c.l.b16 %v266
    %v401 = vunpack.c.l.b16 %v267
    %v402 = vunpack.c.l.b16 %v268
    %v403 = vunpack.c.l.b16 %v269
    %v404 = vunpack.c.l.b16 %v270
    %v405 = vunpack.c.l.b16 %v271
    %v406 = vunpack.c.l.b16 %v272
    %v407 = vunpack.c.l.b16 %v273
    %v408 = vunpack.c.l.b16 %v274
    %v409 = vunpack.c.l.b16 %v275
    %v410 = vunpack.c.l.b16 %v276
    %v411 = vunpack.c.l.b16 %v277
    %v412 = vunpack.c.l.b16 %v278
    %v413 = vunpack.c.l.b16 %v279
    %v414 = vunpack.c.l.b16 %v280
    %v415 = vunpack.c.l.b16 %v281
    %v416 = vunpack.c.l.b16 %v282
    %v417 = vunpack.c.l.b16 %v283
    %v418 = vunpack.c.l.b16 %v284
    %v419 = vunpack.c.l.b16 %v285
    %v420 = vunpack.c.l.b16 %v286
    %v421 = vunpack.c.l.b16 %v287
    %v422 = vunpack.c.l.b16 %v288
    %v423 = vunpack.c.l.b16 %v289
    %v424 = vunpack.c.l.b16 %v290
    %v425 = vunpack.c.l.b16 %v291
    %v426 = vunpack.c.l.b16 %v292
    %v427 = vunpack.c.l.b16 %v293
    %v428 = vunpack.c.l.b16 %v294
    %v429 = vunpack.c.l.b16 %v295
    %v430 = vunpack.c.l.b16 %v296
    %v431 = vunpack.c.l.b16 %v297
    %v432 = vunpack.c.l.b16 %v298
    %v433 = vunpack.c.l.b16 %v299
    %v434 = vunpack.c.l.b16 %v300
    %v435 = vunpack.c.l.b16 %v301
    %v436 = vunpack.c.l.b16 %v302
    %v437 = vpack.c.b16 %v374, %v373
    %v438 = vpack.c.b16 %v376, %v375
    %v439 = vpack.c.b16 %v378, %v377
    %v440 = vpack.c.b16 %v380, %v379
    %v441 = vpack.c.b16 %v382, %v381
    %v442 = vpack.c.b16 %v384, %v383
    %v443 = vpack.c.b16 %v386, %v385
    %v444 = vpack.c.b16 %v388, %v387
    %v445 = vpack.c.b16 %v390, %v389
    %v446 = vpack.c.b16 %v392, %v391
    %v447 = vpack.c.b16 %v394, %v393
    %v448 = vpack.c.b16 %v396, %v395
    %v449 = vpack.c.b16 %v398, %v397
    %v450 = vpack.c.b16 %v400, %v399
    %v451 = vpack.c.b16 %v402, %v401
    %v452 = vpack.c.b16 %v404, %v403
    %v453 = vpack.c.b16 %v406, %v405
    %v454 = vpack.c.b16 %v408, %v407
    %v455 = vpack.c.b16 %v410, %v409
    %v456 = vpack.c.b16 %v412, %v411
    %v457 = vpack.c.b16 %v414, %v413
    %v458 = vpack.c.b16 %v416, %v415
    %v459 = vpack.c.b16 %v418, %v417
    %v460 = vpack.c.b16 %v420, %v419
    %v461 = vpack.c.b16 %v422, %v421
    %v462 = vpack.c.b16 %v424, %v423
    %v463 = vpack.c.b16 %v426, %v425
    %v464 = vpack.c.b16 %v428, %v427
    %v465 = vpack.c.b16 %v430, %v429
    %v466 = vpack.c.b16 %v432, %v431
    %v467 = vpack.c.b16 %v434, %v433
    %v468 = vpack.c.b16 %v436, %v435
    %501 = vmatprep.subr.bf16.mxu0 0
    %502 = vmatpush1.bf16.msra.mxu0 %v444
    %503 = vmatprep.subr.bf16.mxu0 0
    %504 = vmatpush1.bf16.msra.mxu0 %v443
    %505 = vmatprep.subr.bf16.mxu0 0
    %506 = vmatpush1.bf16.msra.mxu0 %v442
    %507 = vmatprep.subr.bf16.mxu0 0
    %508 = vmatpush1.bf16.msra.mxu0 %v441
    %509 = vmatprep.subr.bf16.mxu0 0
    %510 = vmatpush1.bf16.msra.mxu0 %v440
    %511 = vmatprep.subr.bf16.mxu0 0
    %512 = vmatpush1.bf16.msra.mxu0 %v439
    %513 = vmatprep.subr.bf16.mxu0 0
    %514 = vmatpush1.bf16.msra.mxu0 %v438
    %515 = vmatprep.subr.bf16.mxu0 0
    %516 = vmatpush1.bf16.msra.mxu0 %v437
    %517 = vmatprep.subr.bf16.mxu0 0
    %518 = vmatpush2.bf16.msra.mxu0 %v452
    %519 = vmatprep.subr.bf16.mxu0 0
    %520 = vmatpush2.bf16.msra.mxu0 %v451
    %521 = vmatprep.subr.bf16.mxu0 0
    %522 = vmatpush2.bf16.msra.mxu0 %v450
    %523 = vmatprep.subr.bf16.mxu0 0
    %524 = vmatpush2.bf16.msra.mxu0 %v449
    %525 = vmatprep.subr.bf16.mxu0 0
    %526 = vmatpush2.bf16.msra.mxu0 %v448
    %527 = vmatprep.subr.bf16.mxu0 0
    %528 = vmatpush2.bf16.msra.mxu0 %v447
    %529 = vmatprep.subr.bf16.mxu0 0
    %530 = vmatpush2.bf16.msra.mxu0 %v446
    %531 = vmatprep.subr.bf16.mxu0 0
    %532 = vmatpush2.bf16.msra.mxu0 %v445
    %533 = vmatprep.mubr.bf16.mxu0 %v236
    %534 = vmatmul.mubr.bf16.gmra.mxu0 %v235
    %v535 = vpop.f32.mrf.mxu0
    %v536 = vadd.f32 %v307, %v535
    %v537 = vpop.f32.mrf.mxu0
    %v538 = vpop.f32.mrf.mxu0
    %v539 = vpop.f32.mrf.mxu0
    %540 = vdwg.mxu0
    %541 = vmatprep.subr.bf16.mxu0 0
    %542 = vmatpush1.bf16.msra.mxu0 %v460
    %543 = vmatprep.subr.bf16.mxu0 0
    %544 = vmatpush1.bf16.msra.mxu0 %v459
    %545 = vmatprep.subr.bf16.mxu0 0
    %546 = vmatpush1.bf16.msra.mxu0 %v458
    %547 = vmatprep.subr.bf16.mxu0 0
    %548 = vmatpush1.bf16.msra.mxu0 %v457
    %549 = vmatprep.subr.bf16.mxu0 0
    %550 = vmatpush1.bf16.msra.mxu0 %v456
    %551 = vmatprep.subr.bf16.mxu0 0
    %552 = vmatpush1.bf16.msra.mxu0 %v455
    %553 = vmatprep.subr.bf16.mxu0 0
    %554 = vmatpush1.bf16.msra.mxu0 %v454
    %555 = vmatprep.subr.bf16.mxu0 0
    %556 = vmatpush1.bf16.msra.mxu0 %v453
    %557 = vmatprep.subr.bf16.mxu0 0
    %558 = vmatpush2.bf16.msra.mxu0 %v468
    %559 = vmatprep.subr.bf16.mxu0 0
    %560 = vmatpush2.bf16.msra.mxu0 %v467
    %561 = vmatprep.subr.bf16.mxu0 0
    %562 = vmatpush2.bf16.msra.mxu0 %v466
    %563 = vmatprep.subr.bf16.mxu0 0
    %564 = vmatpush2.bf16.msra.mxu0 %v465
    %565 = vmatprep.subr.bf16.mxu0 0
    %566 = vmatpush2.bf16.msra.mxu0 %v464
    %567 = vmatprep.subr.bf16.mxu0 0
    %568 = vmatpush2.bf16.msra.mxu0 %v463
    %569 = vmatprep.subr.bf16.mxu0 0
    %570 = vmatpush2.bf16.msra.mxu0 %v462
    %571 = vmatprep.subr.bf16.mxu0 0
    %572 = vmatpush2.bf16.msra.mxu0 %v461
    %573 = vmatprep.mubr.bf16.mxu0 %v238
    %574 = vmatmul.mubr.bf16.gmra.mxu0 %v237
    %v575 = vpop.f32.mrf.mxu0
    %v576 = vadd.f32 %v536, %v575
    %v577 = vpop.f32.mrf.mxu0
    %v578 = vpop.f32.mrf.mxu0
    %v579 = vpop.f32.mrf.mxu0
    %580 = vdwg.mxu0
    %581 = vmax.xlane.f32.xlu0 %v576
    %v582 = vpop.xlane.xlu0 %581
    %v583 = vsub.f32 %v576, %v582
    %v584 = vmul.f32 %v583, 1.442695
    %v585 = vpow.pop %v584
    %586 = vadd.xlane.f32.xlu0 %v585
    %v587 = vpop.xlane.xlu0 %586
    %v588 = vlog2.pop %v587
    %v589 = vmul.f32 %v588, 0.6931472
    %v590 = vsub.f32 %v583, %v589
    %591 = vst [vmem:[%s5] sm:$0xff] %v590
    // Predicated region
    $region38: #{discriminator_forward.1} parent=1 // pred_check
      _
    $region39: #{discriminator_forward.1} parent=1 // pred_check_branch
      %593 = sbr.rel (0) target = $region41
    $region40: #{discriminator_forward.1} parent=1 // pred_region
      _
    $region41: #{discriminator_forward.1} parent=1 // pred_fallthru
      _
    // Predicated region
    $region42: #{discriminator_forward.1} parent=1 // pred_check
      _
    $region43: #{discriminator_forward.1} parent=1 // pred_check_branch
      %595 = sbr.rel (0) target = $region45
    $region44: #{discriminator_forward.1} parent=1 // pred_region
      _
    $region45: #{discriminator_forward.1} parent=1 // pred_fallthru
      _
    %596 = vsyncpa [#allocation3], 1
    %597 = vsyncpa [#allocation5], 1
    %598 = vsyncpa [#allocation8], 1

</llo_original>
